<compile_context>
chip_gen: v7x
topology: tpu7x:2x2x1
jax: 0.10.0
libtpu: 0.0.40
codegen_flags: <defaults>
</compile_context>

<pallas_src>
import jax
import jax.numpy as jnp
from jax.experimental import pallas as pl
from jax.experimental.pallas import tpu as pltpu


def _round_up(x, m):
    return ((x + m - 1) // m) * m


def _vmem_limit_bytes(need_bytes):
    """Generation-aware VMEM budget with headroom for compiler scratch."""
    try:
        cap = int(pltpu.get_tpu_info().vmem_capacity_bytes)
    except Exception:
        cap = 64 << 20  # conservative fallback (v7x physical VMEM per TC)
    cap = max(cap - (16 << 20), 16 << 20)          # leave headroom
    return int(min(max(need_bytes + (4 << 20), 16 << 20), cap))


def _temp_scale_kernel(t_ref, x_ref, w_ref, b_ref, o_ref):
    # t_ref: SMEM (1,)      temperature scalar
    # x_ref: VMEM (tm, Hu)  streamed input rows (f32 or bf16)
    # w_ref: VMEM (Hu, tn)  classifier weight tile
    # b_ref: VMEM (1, tn)   classifier bias tile (f32)
    # o_ref: VMEM (tm, tn)  temperature-scaled logits (f32)
    inv_t = 1.0 / t_ref[0]  # scalar reciprocal once per tile; vector op is a mul
    logits = jnp.dot(x_ref[...], w_ref[...],
                     preferred_element_type=jnp.float32) + b_ref[...]
    o_ref[...] = logits * inv_t


def model_with_temperature_forward(x, weight, bias, temperature, *,
                                   block_m=512, block_n=512, use_bf16=False):
    """x: [B, S, H] -> temperature-scaled logits [B, S, C] (float32)."""
    B, S, H = x.shape
    Hw, C = weight.shape
    assert Hw == H
    M = B * S

    in_dtype = jnp.bfloat16 if use_bf16 else jnp.float32
    itemsize = 2 if use_bf16 else 4

    x2d = x.reshape(M, H).astype(in_dtype)
    w = weight.astype(in_dtype)
    b = bias.reshape(1, C).astype(jnp.float32)

    # Pad contraction / class dims only when they are not lane-aligned
    # (avoids the extra HBM round trips over x / out in the aligned case).
    if H % 128 != 0:
        Hu = _round_up(H, 128)
        x2d = jnp.zeros((M, Hu), in_dtype).at[:, :H].set(x2d)
        w = jnp.zeros((Hu, C), in_dtype).at[:H, :].set(w)
    else:
        Hu = H

    if C % 128 != 0:
        Cu = _round_up(C, 128)
        w = jnp.zeros((Hu, Cu), in_dtype).at[:, :C].set(w)
        b = jnp.zeros((1, Cu), jnp.float32).at[:, :C].set(b)
    else:
        Cu = C

    t = temperature.reshape(1).astype(jnp.float32)

    # Tile sizes: rows 8-aligned, classes 128-aligned; M is NOT rounded up to
    # a tile multiple — Pallas masks the partial edge blocks.
    tm = min(block_m, _round_up(M, 8))
    tn = min(block_n, Cu)
    grid_m = pl.cdiv(M, tm)
    grid_n = pl.cdiv(Cu, tn)

    # Weight/bias are resident (constant index map) when grid_n == 1:
    # single-buffer them instead of wasting the second pipeline buffer.
    resident_wb = grid_n == 1
    if resident_wb:
        w_spec = pl.BlockSpec((Hu, tn), lambda i, j: (0, j),
                              pipeline_mode=pl.Buffered(1))
        b_spec = pl.BlockSpec((1, tn), lambda i, j: (0, j),
                              pipeline_mode=pl.Buffered(1))
        wb_bufs = 1
    else:
        w_spec = pl.BlockSpec((Hu, tn), lambda i, j: (0, j))
        b_spec = pl.BlockSpec((1, tn), lambda i, j: (0, j))
        wb_bufs = 2

    need_bytes = (2 * tm * Hu * itemsize        # x tiles (double-buffered)
                  + 2 * tm * tn * 4             # out tiles (double-buffered)
                  + wb_bufs * Hu * tn * itemsize
                  + wb_bufs * tn * 4)
    vmem_limit = _vmem_limit_bytes(need_bytes)

    out = pl.pallas_call(
        _temp_scale_kernel,
        out_shape=jax.ShapeDtypeStruct((M, Cu), jnp.float32),
        grid=(grid_m, grid_n),
        in_specs=[
            pl.BlockSpec(memory_space=pltpu.SMEM),          # temperature scalar
            pl.BlockSpec((tm, Hu), lambda i, j: (i, 0)),    # x rows (streamed)
            w_spec,                                         # weight tile
            b_spec,                                         # bias tile
        ],
        out_specs=pl.BlockSpec((tm, tn), lambda i, j: (i, j)),
        compiler_params=pltpu.CompilerParams(
            dimension_semantics=("parallel", "parallel"),   # 2-TC sharding on v7x
            vmem_limit_bytes=vmem_limit,
        ),
    )(t, x2d, w, b)

    if Cu != C:
        out = out[:, :C]
    # TODO(synk): for very large H add a K grid axis with an f32 VMEM
    # accumulator (pl.when init/finalize) instead of holding full-H tiles.
    return out.reshape(B, S, C)


if __name__ == "__main__":
    def run_case(key, B, S, H, C, *, use_bf16=False, atol=1e-5, rtol=1e-5,
                 block_m=512, block_n=512):
        k_x, k_w, k_b = jax.random.split(key, 3)
        x = jax.random.normal(k_x, (B, S, H), dtype=jnp.float32)
        weight = jax.random.normal(k_w, (H, C), dtype=jnp.float32) * 0.1
        bias = jax.random.normal(k_b, (C,), dtype=jnp.float32) * 0.1
        # nn.Parameter(torch.ones(1) * 1.5)
        temperature = jnp.ones((1,), dtype=jnp.float32) * 1.5

        out = model_with_temperature_forward(
            x, weight, bias, temperature,
            block_m=block_m, block_n=block_n, use_bf16=use_bf16)
        out = jax.block_until_ready(out)

        ref = ((x.reshape(B * S, H) @ weight + bias) / temperature[0]
               ).reshape(B, S, C)
        assert out.shape == (B, S, C)
        assert jnp.allclose(out, ref, atol=atol, rtol=rtol), (
            f"mismatch (H={H}, C={C}, bf16={use_bf16}): "
            f"max abs err {float(jnp.max(jnp.abs(out - ref)))}")

    key = jax.random.PRNGKey(0)
    k1, k2, k3, k4 = jax.random.split(key, 4)

    # Non-lane-aligned H/C -> exercises the padded fallback path.
    run_case(k1, 2, 8, 32, 16)
    # Lane-aligned H/C -> fast path, no pad/slice HBM round trips.
    run_case(k2, 2, 8, 128, 256)
    # bf16 streamed x/weight with f32 MXU accumulation (accuracy-gated).
    run_case(k3, 2, 8, 128, 256, use_bf16=True, atol=5e-2, rtol=5e-2)
    # Multi-tile 2-D grid (grid_m=2, grid_n=2), weight default-buffered.
    run_case(k4, 2, 8, 128, 1024, block_m=8, block_n=512)

    # TODO(synk): set_temperature (LBFGS NLL fit) and _ECELoss are host-side
    # training/eval diagnostics, not part of the forward pass; not implemented
    # as kernels.
    print("KERNEL_OK")
</pallas_src>

<mosaic_0001>
module attributes {stable_mosaic.version = 11 : i64} {
  func.func @_temp_scale_kernel(%arg0: i32, %arg1: i32, %arg2: memref<1xf32, #tpu.memory_space<smem>>, %arg3: memref<16x128xf32, #tpu.memory_space<vmem>>, %arg4: memref<128x128xf32, #tpu.memory_space<vmem>>, %arg5: memref<1x128xf32, #tpu.memory_space<vmem>>, %arg6: memref<16x128xf32, #tpu.memory_space<vmem>>) attributes {dimension_semantics = [#tpu.dimension_semantics<parallel>, #tpu.dimension_semantics<parallel>], iteration_bounds = array<i64: 1, 1>, scalar_prefetch = 0 : i64, scratch_operands = 0 : i64, tpu.core_type = #tpu.core_type<tc>, window_params = [{transform_indices = @transform_0, window_bounds = array<i64: 1>}, {transform_indices = @transform_1, window_bounds = array<i64: 16, 128>}, {pipeline_mode = #tpu.pipeline_mode<synchronous>, transform_indices = @transform_2, window_bounds = array<i64: 128, 128>}, {pipeline_mode = #tpu.pipeline_mode<synchronous>, transform_indices = @transform_3, window_bounds = array<i64: 1, 128>}, {transform_indices = @transform_4, window_bounds = array<i64: 16, 128>}]} {
    %c0 = arith.constant 0 : index
    %0 = memref.load %arg2[%c0] : memref<1xf32, #tpu.memory_space<smem>>
    %cst = arith.constant 1.000000e+00 : f32
    %1 = arith.divf %cst, %0 : f32
    %c0_0 = arith.constant 0 : index
    %c0_1 = arith.constant 0 : index
    %2 = vector.load %arg3[%c0_0, %c0_1] : memref<16x128xf32, #tpu.memory_space<vmem>>, vector<16x128xf32>
    %c0_2 = arith.constant 0 : index
    %c0_3 = arith.constant 0 : index
    %3 = vector.load %arg4[%c0_2, %c0_3] : memref<128x128xf32, #tpu.memory_space<vmem>>, vector<128x128xf32>
    %cst_4 = arith.constant dense<0.000000e+00> : vector<16x128xf32>
    %4 = tpu.matmul %2, %3, %cst_4 {dimension_numbers = #tpu.dot_dimension_numbers<[1], [0], [0], [1], [0, 0, 1, 1], [], []>} : vector<16x128xf32>, vector<128x128xf32>, vector<16x128xf32> -> vector<16x128xf32>
    %c0_5 = arith.constant 0 : index
    %c0_6 = arith.constant 0 : index
    %5 = vector.load %arg5[%c0_5, %c0_6] : memref<1x128xf32, #tpu.memory_space<vmem>>, vector<1x128xf32>
    %6 = vector.broadcast %5 : vector<1x128xf32> to vector<16x128xf32>
    %7 = arith.addf %4, %6 : vector<16x128xf32>
    %8 = vector.broadcast %1 : f32 to vector<16x128xf32>
    %9 = arith.mulf %7, %8 : vector<16x128xf32>
    %c0_7 = arith.constant 0 : index
    %c0_8 = arith.constant 0 : index
    %10 = vector.load %arg6[%c0_7, %c0_8] : memref<16x128xf32, #tpu.memory_space<vmem>>, vector<16x128xf32>
    tpu.vector_store %arg6[%c0_7, %c0_8], %9 {strides = array<i32>} : memref<16x128xf32, #tpu.memory_space<vmem>>, vector<16x128xf32>,
    return
  }
  func.func @transform_0(%arg0: i32, %arg1: i32) -> i32 {
    %c0_i32 = arith.constant 0 : i32
    %c0_i32_0 = arith.constant 0 : i32
    return %c0_i32 : i32
  }
  func.func @transform_1(%arg0: i32, %arg1: i32) -> (i32, i32) {
    %c0_i32 = arith.constant 0 : i32
    %c0_i32_0 = arith.constant 0 : i32
    return %arg0, %c0_i32 : i32, i32
  }
  func.func @transform_2(%arg0: i32, %arg1: i32) -> (i32, i32) {
    %c0_i32 = arith.constant 0 : i32
    %c0_i32_0 = arith.constant 0 : i32
    return %c0_i32, %arg1 : i32, i32
  }
  func.func @transform_3(%arg0: i32, %arg1: i32) -> (i32, i32) {
    %c0_i32 = arith.constant 0 : i32
    %c0_i32_0 = arith.constant 0 : i32
    return %c0_i32, %arg1 : i32, i32
  }
  func.func @transform_4(%arg0: i32, %arg1: i32) -> (i32, i32) {
    %c0_i32 = arith.constant 0 : i32
    return %arg0, %arg1 : i32, i32
  }
}

</mosaic_0001>

<llo_original>
// kernel: tpu_custom_call.1
$region0: #{tpu_custom_call.1}
  #allocation0 [shape = 'u32[]', space=smem, size = 0x4, offset = 0x4, fixed_abs, tag = 'smem constant byte address 0x4 - core index']
  #allocation1 [shape = 'u32[144,128]{1,0:T(1,128)}', space=vmem, size = 0x12000, scoped, tag = 'internal scratch']
  #allocation2 [shape = 'f32[1]{0:T(128)S(6)}', space=smem, size = 0x200, scoped, tag = 'scoped memory for tpu_custom_call.1']
  %s0 = inlined_call_operand.<no memory space> [shape: f32[1], index: 0, kind: input, shape index: {}]
  %s1 = inlined_call_operand.hbm [shape: f32[16,128], index: 1, kind: input, shape index: {}]
  %s2 = inlined_call_operand.hbm [shape: f32[128,128], index: 2, kind: input, shape index: {}]
  %s3 = inlined_call_operand.vmem [shape: f32[1,128], index: 3, kind: input, shape index: {}]
  %s4 = inlined_call_operand.hbm [shape: f32[16,128], index: 4, kind: output, shape index: {}]
  %s5 = sld [smem:[#allocation0]]
  $region34: #{tpu_custom_call.1} parent=0
    _
  %s7 = ssub.s32 1, %s5
  %s8 = scalar_select 0, %s7, %s5
  %9 = sst [smem:[#allocation2]] %s0
  $region1: #{tpu_custom_call.1} parent=0
    #allocation3 [shape = 'u8[8192]{0}', space=vmem, size = 0x2000, scoped, tag = 'input window, operand 1, single buffered']
    #allocation4 [shape = 's32[1]{0}', space=sflag, size = 0x4, scoped, tag = 'scoped memory for tpu_custom_call.1']
    #allocation5 [shape = 's32[1]{0}', space=sflag, size = 0x4, scoped, tag = 'scoped memory for tpu_custom_call.1']
    #allocation6 [shape = 'u8[65536]{0}', space=vmem, size = 0x10000, scoped, tag = 'input window, operand 2, single buffered']
    #allocation7 [shape = 's32[1]{0}', space=sflag, size = 0x4, scoped, tag = 'scoped memory for tpu_custom_call.1']
    #allocation8 [shape = 'u8[8192]{0}', space=vmem, size = 0x2000, scoped, tag = 'output window, operand 0, single buffered']
    %10 = vsyncpa [#allocation4], 0
    %11 = vsyncpa [#allocation7], 0
    %12 = vsyncpa [#allocation5], 0
    // Predicated region
    $region2: #{tpu_custom_call.1} parent=1 // pred_check
      _
    $region3: #{tpu_custom_call.1} parent=1 // pred_check_branch
      %14 = sbr.rel (0) target = $region5
    $region4: #{tpu_custom_call.1} parent=1 // pred_region
      _
    $region5: #{tpu_custom_call.1} parent=1 // pred_fallthru
      _
    // Predicated region
    $region6: #{tpu_custom_call.1} parent=1 // pred_check
      _
    $region7: #{tpu_custom_call.1} parent=1 // pred_check_branch
      %16 = sbr.rel (0) target = $region9
    $region8: #{tpu_custom_call.1} parent=1 // pred_region
      %s18 = ssub.s32 256, 256
      %19 = vsyncadd [#allocation4], %s18
      %s20 = sshll.u32 [#allocation3], 4
      %s21 = int_to_ptr.vmem [resolvable:$true] %s20
      %26 = dma.hbm_to_vmem [thread:$0]  %s1, 256, %s21, [#allocation4], 128, 128, 8
    $region9: #{tpu_custom_call.1} parent=1 // pred_fallthru
      _
    // Predicated region
    $region10: #{tpu_custom_call.1} parent=1 // pred_check
      _
    $region11: #{tpu_custom_call.1} parent=1 // pred_check_branch
      %28 = sbr.rel (0) target = $region13
    $region12: #{tpu_custom_call.1} parent=1 // pred_region
      %s30 = ssub.s32 2048, 2048
      %31 = vsyncadd [#allocation7], %s30
      %s32 = sshll.u32 [#allocation6], 4
      %s33 = int_to_ptr.vmem [resolvable:$true] %s32
      %38 = dma.hbm_to_vmem [thread:$0]  %s2, 2048, %s33, [#allocation7], 128, 128, 8
    $region13: #{tpu_custom_call.1} parent=1 // pred_fallthru
      _
    // Predicated region
    $region14: #{tpu_custom_call.1} parent=1 // pred_check
      _
    $region15: #{tpu_custom_call.1} parent=1 // pred_check_branch
      %40 = sbr.rel (0) target = $region17
    $region16: #{tpu_custom_call.1} parent=1 // pred_region
      _
    $region17: #{tpu_custom_call.1} parent=1 // pred_fallthru
      _
    // Predicated region
    $region18: #{tpu_custom_call.1} parent=1 // pred_check
      _
    $region19: #{tpu_custom_call.1} parent=1 // pred_check_branch
      %42 = sbr.rel (0) target = $region21
    $region20: #{tpu_custom_call.1} parent=1 // pred_region
      %43 = dma.done [#allocation4], 256
    $region21: #{tpu_custom_call.1} parent=1 // pred_fallthru
      _
    // Predicated region
    $region22: #{tpu_custom_call.1} parent=1 // pred_check
      _
    $region23: #{tpu_custom_call.1} parent=1 // pred_check_branch
      %45 = sbr.rel (0) target = $region25
    $region24: #{tpu_custom_call.1} parent=1 // pred_region
      %46 = dma.done [#allocation7], 2048
    $region25: #{tpu_custom_call.1} parent=1 // pred_fallthru
      _
    %s47 = sld [smem:[#allocation2]]
    %v48 = vstv %s47
    %v49 = vrcp.pop %v48
    %s50 = vtos %v49
    %v51 = vld [vmem:[#allocation3] sm:$0xff]
    %v52 = vld [vmem:[#allocation3 + $0x8] sm:$0xff]
    %v53 = vld [vmem:[#allocation6] sm:$0xff]
    %v54 = vld [vmem:[#allocation6 + $0x8] sm:$0xff]
    %v55 = vld [vmem:[#allocation6 + $0x10] sm:$0xff]
    %v56 = vld [vmem:[#allocation6 + $0x18] sm:$0xff]
    %v57 = vld [vmem:[#allocation6 + $0x20] sm:$0xff]
    %v58 = vld [vmem:[#allocation6 + $0x28] sm:$0xff]
    %v59 = vld [vmem:[#allocation6 + $0x30] sm:$0xff]
    %v60 = vld [vmem:[#allocation6 + $0x38] sm:$0xff]
    %v61 = vld [vmem:[#allocation6 + $0x40] sm:$0xff]
    %v62 = vld [vmem:[#allocation6 + $0x48] sm:$0xff]
    %v63 = vld [vmem:[#allocation6 + $0x50] sm:$0xff]
    %v64 = vld [vmem:[#allocation6 + $0x58] sm:$0xff]
    %v65 = vld [vmem:[#allocation6 + $0x60] sm:$0xff]
    %v66 = vld [vmem:[#allocation6 + $0x68] sm:$0xff]
    %v67 = vld [vmem:[#allocation6 + $0x70] sm:$0xff]
    %v68 = vld [vmem:[#allocation6 + $0x78] sm:$0xff]
    %v69 = vld [vmem:[%s3] sm:$0x1]
    %v71 = vlaneseq
    %v72 = vshrl.u32 %v71, 7
    %v73 = vsub.s32 0, %v72
    %v74 = vrot.slane %v69, %v73
    %76 = vmatprep.subr.mxu0 0.0
    %77 = vmatpush1.msra.mxu0 %v53
    %78 = vmatprep.subr.mxu0 0.0
    %79 = vmatpush1.msra.mxu0 %v54
    %80 = vmatprep.subr.mxu0 0.0
    %81 = vmatpush1.msra.mxu0 %v55
    %82 = vmatprep.subr.mxu0 0.0
    %83 = vmatpush1.msra.mxu0 %v56
    %84 = vmatprep.subr.mxu0 0.0
    %85 = vmatpush1.msra.mxu0 %v57
    %86 = vmatprep.subr.mxu0 0.0
    %87 = vmatpush1.msra.mxu0 %v58
    %88 = vmatprep.subr.mxu0 0.0
    %89 = vmatpush1.msra.mxu0 %v59
    %90 = vmatprep.subr.mxu0 0.0
    %91 = vmatpush1.msra.mxu0 %v60
    %92 = vmatprep.subr.mxu0 0.0
    %93 = vmatpush1.msra.mxu0 %v61
    %94 = vmatprep.subr.mxu0 0.0
    %95 = vmatpush1.msra.mxu0 %v62
    %96 = vmatprep.subr.mxu0 0.0
    %97 = vmatpush1.msra.mxu0 %v63
    %98 = vmatprep.subr.mxu0 0.0
    %99 = vmatpush1.msra.mxu0 %v64
    %100 = vmatprep.subr.mxu0 0.0
    %101 = vmatpush1.msra.mxu0 %v65
    %102 = vmatprep.subr.mxu0 0.0
    %103 = vmatpush1.msra.mxu0 %v66
    %104 = vmatprep.subr.mxu0 0.0
    %105 = vmatpush1.msra.mxu0 %v67
    %106 = vmatprep.subr.mxu0 0.0
    %107 = vmatpush1.msra.mxu0 %v68
    %108 = vmatprep.subr.mxu0 0.0
    %109 = vmatpush1.msra.mxu0 0.0
    %110 = vmatprep.subr.mxu0 0.0
    %111 = vmatpush1.msra.mxu0 0.0
    %112 = vmatprep.subr.mxu0 0.0
    %113 = vmatpush1.msra.mxu0 0.0
    %114 = vmatprep.subr.mxu0 0.0
    %115 = vmatpush1.msra.mxu0 0.0
    %116 = vmatprep.subr.mxu0 0.0
    %117 = vmatpush1.msra.mxu0 0.0
    %118 = vmatprep.subr.mxu0 0.0
    %119 = vmatpush1.msra.mxu0 0.0
    %120 = vmatprep.subr.mxu0 0.0
    %121 = vmatpush1.msra.mxu0 0.0
    %122 = vmatprep.subr.mxu0 0.0
    %123 = vmatpush1.msra.mxu0 0.0
    %124 = vmatprep.subr.mxu0 0.0
    %125 = vmatpush1.msra.mxu0 0.0
    %126 = vmatprep.subr.mxu0 0.0
    %127 = vmatpush1.msra.mxu0 0.0
    %128 = vmatprep.subr.mxu0 0.0
    %129 = vmatpush1.msra.mxu0 0.0
    %130 = vmatprep.subr.mxu0 0.0
    %131 = vmatpush1.msra.mxu0 0.0
    %132 = vmatprep.subr.mxu0 0.0
    %133 = vmatpush1.msra.mxu0 0.0
    %134 = vmatprep.subr.mxu0 0.0
    %135 = vmatpush1.msra.mxu0 0.0
    %136 = vmatprep.subr.mxu0 0.0
    %137 = vmatpush1.msra.mxu0 0.0
    %138 = vmatprep.subr.mxu0 0.0
    %139 = vmatpush1.msra.mxu0 0.0
    %140 = vmatprep.mubr.f32.mxu0 0.0
    %141 = vmatmul.mubr.f32.gmra.mrb[0].mxu0 %v51
    %v142 = vpop.f32.mrb[0].mxu0
    %v143 = vadd.f32 %v74, %v142
    %v144 = vpop.f32.mrb[0].mxu0
    %145 = vmatprep.mubr.f32.mxu0 0.0
    %146 = vmatmul.mubr.f32.gmra.mrb[0].mxu0 %v52
    %v147 = vpop.f32.mrb[0].mxu0
    %v148 = vadd.f32 %v74, %v147
    %v149 = vpop.f32.mrb[0].mxu0
    %150 = vdwg.mxu0
    %v151 = vstv %s50
    %v152 = vmul.f32 %v143, %v151
    %v153 = vmul.f32 %v148, %v151
    %154 = vst [vmem:[#allocation8] sm:$0xff] %v152
    %155 = vst [vmem:[#allocation8 + $0x8] sm:$0xff] %v153
    // Predicated region
    $region26: #{tpu_custom_call.1} parent=1 // pred_check
      _
    $region27: #{tpu_custom_call.1} parent=1 // pred_check_branch
      %157 = sbr.rel (0) target = $region29
    $region28: #{tpu_custom_call.1} parent=1 // pred_region
      %s159 = ssub.s32 256, 256
      %160 = vsyncadd [#allocation5], %s159
      %s161 = sshll.u32 [#allocation8], 4
      %s162 = int_to_ptr.vmem [resolvable:$true] %s161
      %167 = dma.vmem_to_hbm [thread:$0]  %s162, 256, %s4, [#allocation5], 128, 128, 8
    $region29: #{tpu_custom_call.1} parent=1 // pred_fallthru
      _
    // Predicated region
    $region30: #{tpu_custom_call.1} parent=1 // pred_check
      _
    $region31: #{tpu_custom_call.1} parent=1 // pred_check_branch
      %169 = sbr.rel (0) target = $region33
    $region32: #{tpu_custom_call.1} parent=1 // pred_region
      %170 = dma.done [#allocation5], 256
    $region33: #{tpu_custom_call.1} parent=1 // pred_fallthru
      _
    %171 = vsyncpa [#allocation4], 1
    %172 = vsyncpa [#allocation7], 1
    %173 = vsyncpa [#allocation5], 1

</llo_original>
